<compile_context>
chip_gen: v5e
topology: v5e:2x2
jax: 0.10.0
libtpu: 0.0.40
codegen_flags: <defaults>
</compile_context>

<pallas_src>
import jax
import jax.numpy as jnp
from jax.experimental import pallas as pl
from jax.experimental.pallas import tpu as pltpu


def _apply_mask_kernel(m_ref, x_ref, o_ref):
    """o = x * mask.  m_ref: (1, TN) f32; x_ref / o_ref: (TB, TN) in X dtype."""
    prod = x_ref[...].astype(jnp.float32) * m_ref[...]
    o_ref[...] = prod.astype(o_ref.dtype)


def _pick_tiles(B, N, itemsize, target_block_bytes):
    """Choose (TB, TN) for a (B, N) elementwise pass.

    Keeps TB a multiple of 8 (or == B) and TN a multiple of 128 (or == N) so
    blocks satisfy the (8, 128) constraint, with block bytes ~= target.
    """
    E = max(1, target_block_bytes // itemsize)  # elements per block budget
    if B * N <= E:
        return B, N
    if N <= E and (E // N) >= min(B, 8):
        cap = E // N
        TB = B if cap >= B else min(B, max(8, (cap // 8) * 8))
        return TB, N
    # A single row (or a few rows) exceeds the budget: tile the lane axis too.
    TB = B if B <= 8 else 8
    TN = min(N, max(128, (E // TB) // 128 * 128))
    return TB, TN


def complex_dropout(X, *, p=0.0, training=False, seed=0,
                    target_block_bytes=4 * 1024 * 1024):
    """Equivalent of ComplexDropout(p).forward(X) with an explicit training flag.

    X: (..., S, H, 2).  The dropout1d mask has shape (S, H, 2): each (s, h)
    channel (real/imag pair) is dropped with probability p, survivors scaled
    by 1/(1-p), and the same mask is broadcast over all leading batch dims.
    TODO(synk): uses an explicit jax.random seed instead of torch's global RNG stream.
    """
    *lead, S, H, two = X.shape
    assert two == 2, "expected complex-last layout (..., 2)"

    if (not training) or p == 0.0:
        # dropout1d of an all-ones mask is the identity; no HBM traffic.
        return X
    if p >= 1.0:
        return jnp.zeros_like(X)

    B = 1
    for d in lead:
        B *= d
    N = S * H * 2

    # One (S, H) keep/drop decision per channel, scaled by 1/(1-p), kept in f32
    # (bf16 inputs still see full-precision mask math; only the product is cast).
    keep = jax.random.bernoulli(jax.random.PRNGKey(seed), 1.0 - p, (S, H))
    scale = jnp.float32(1.0 / (1.0 - p))
    mask_sh = jnp.where(keep, scale, jnp.float32(0.0))                   # (S, H)
    mask = jnp.broadcast_to(mask_sh[:, :, None], (S, H, 2)).reshape(1, N)  # (1, S*2H)

    x2 = X.reshape(B, N)  # free view: lane-dense, real/imag interleaved
    itemsize = X.dtype.itemsize
    TB, TN = _pick_tiles(B, N, itemsize, target_block_bytes)
    grid = (pl.cdiv(B, TB), pl.cdiv(N, TN))

    cost = pl.CostEstimate(
        flops=B * N,
        transcendentals=0,
        bytes_accessed=2 * B * N * itemsize + N * 4,
    )

    out = pl.pallas_call(
        _apply_mask_kernel,
        out_shape=jax.ShapeDtypeStruct((B, N), X.dtype),
        grid_spec=pl.GridSpec(
            grid=grid,
            in_specs=[
                # Mask tile: index depends only on the lane-tile index, so when
                # TN == N the block index is constant and the mask stays resident.
                pl.BlockSpec((1, TN), lambda i, j: (0, j)),
                pl.BlockSpec((TB, TN), lambda i, j: (i, j)),
            ],
            out_specs=pl.BlockSpec((TB, TN), lambda i, j: (i, j)),
        ),
        compiler_params=pltpu.CompilerParams(
            dimension_semantics=("parallel", "parallel"),
            vmem_limit_bytes=48 * 1024 * 1024,
        ),
        cost_estimate=cost,
    )(mask, x2)
    return out.reshape(X.shape)


if __name__ == "__main__":
    key = jax.random.PRNGKey(0)
    B, S, H = 4, 8, 16  # 2*H = 32 -> flattened lane axis N = 256
    X = jax.random.normal(key, (B, S, H, 2), dtype=jnp.float32)

    # Inference / p == 0 path: identity (dropout1d of an all-ones mask).
    Z_eval = complex_dropout(X, p=0.5, training=False)
    assert Z_eval.shape == X.shape and bool(jnp.all(Z_eval == X))
    Z_p0 = complex_dropout(X, p=0.0, training=True)
    assert bool(jnp.all(Z_p0 == X))

    # Training path with p > 0 exercises the Pallas kernel.
    p, seed = 0.5, 123
    Z = jax.block_until_ready(complex_dropout(X, p=p, training=True, seed=seed))
    assert Z.shape == X.shape and Z.dtype == X.dtype

    # Pure-JAX reference using the same mask construction.
    keep_ref = jax.random.bernoulli(jax.random.PRNGKey(seed), 1.0 - p, (S, H))
    ref = X * (keep_ref[None, :, :, None].astype(jnp.float32) / (1.0 - p))
    assert bool(jnp.allclose(Z, ref, atol=1e-6, rtol=1e-6))

    # Structural torch semantics: each (s, h) channel is either all-zero or
    # scaled by 1/(1-p), identically across the batch and the real/imag pair.
    scaled = X / (1.0 - p)
    is_zero = jnp.all(Z == 0.0, axis=(0, 3))                            # (S, H)
    is_kept = jnp.all(jnp.isclose(Z, scaled, atol=1e-5), axis=(0, 3))   # (S, H)
    assert bool(jnp.all(jnp.logical_or(is_zero, is_kept)))
    drop_frac = float(jnp.mean(is_zero.astype(jnp.float32)))
    assert 0.2 < drop_frac < 0.8, drop_frac

    # Same seed -> identical mask (deterministic).
    Z2 = complex_dropout(X, p=p, training=True, seed=seed)
    assert bool(jnp.all(Z == Z2))

    print("KERNEL_OK")
</pallas_src>

<mosaic_0001>
module attributes {stable_mosaic.version = 11 : i64} {
  func.func @_apply_mask_kernel(%arg0: i32, %arg1: i32, %arg2: memref<1x256xf32, #tpu.memory_space<vmem>>, %arg3: memref<4x256xf32, #tpu.memory_space<vmem>>, %arg4: memref<4x256xf32, #tpu.memory_space<vmem>>) attributes {dimension_semantics = [#tpu.dimension_semantics<parallel>, #tpu.dimension_semantics<parallel>], iteration_bounds = array<i64: 1, 1>, scalar_prefetch = 0 : i64, scratch_operands = 0 : i64, tpu.core_type = #tpu.core_type<tc>, window_params = [{transform_indices = @transform_0, window_bounds = array<i64: 1, 256>}, {transform_indices = @transform_1, window_bounds = array<i64: 4, 256>}, {transform_indices = @transform_2, window_bounds = array<i64: 4, 256>}]} {
    %c0 = arith.constant 0 : index
    %c0_0 = arith.constant 0 : index
    %0 = vector.load %arg3[%c0, %c0_0] : memref<4x256xf32, #tpu.memory_space<vmem>>, vector<4x256xf32>
    %c0_1 = arith.constant 0 : index
    %c0_2 = arith.constant 0 : index
    %1 = vector.load %arg2[%c0_1, %c0_2] : memref<1x256xf32, #tpu.memory_space<vmem>>, vector<1x256xf32>
    %2 = vector.broadcast %1 : vector<1x256xf32> to vector<4x256xf32>
    %3 = arith.mulf %0, %2 : vector<4x256xf32>
    %c0_3 = arith.constant 0 : index
    %c0_4 = arith.constant 0 : index
    %4 = vector.load %arg4[%c0_3, %c0_4] : memref<4x256xf32, #tpu.memory_space<vmem>>, vector<4x256xf32>
    tpu.vector_store %arg4[%c0_3, %c0_4], %3 {strides = array<i32>} : memref<4x256xf32, #tpu.memory_space<vmem>>, vector<4x256xf32>,
    return
  }
  func.func @transform_0(%arg0: i32, %arg1: i32) -> (i32, i32) {
    %c0_i32 = arith.constant 0 : i32
    %c0_i32_0 = arith.constant 0 : i32
    return %c0_i32, %arg1 : i32, i32
  }
  func.func @transform_1(%arg0: i32, %arg1: i32) -> (i32, i32) {
    %c0_i32 = arith.constant 0 : i32
    return %arg0, %arg1 : i32, i32
  }
  func.func @transform_2(%arg0: i32, %arg1: i32) -> (i32, i32) {
    %c0_i32 = arith.constant 0 : i32
    return %arg0, %arg1 : i32, i32
  }
}

</mosaic_0001>

<llo_original>
// kernel: tpu_custom_call.1
$region0: #{tpu_custom_call.1}
  #allocation0 [shape = 'u32[]', space=smem, size = 0x4, offset = 0x4, fixed_abs, tag = 'smem constant byte address 0x4 - core index']
  #allocation1 [shape = 'u32[72,128]{1,0:T(1,128)}', space=vmem, size = 0x9000, scoped, tag = 'internal scratch']
  %s0 = inlined_call_operand.hbm [shape: f32[1,256], index: 0, kind: input, shape index: {}]
  %s1 = inlined_call_operand.hbm [shape: f32[4,256], index: 1, kind: input, shape index: {}]
  %s2 = inlined_call_operand.hbm [shape: f32[4,256], index: 2, kind: output, shape index: {}]
  %s3 = sld [smem:[#allocation0]]
  $region26: #{tpu_custom_call.1} parent=0
    _
  %s5 = ssub.s32 1, %s3
  %s6 = scalar_select 0, %s5, %s3
  $region1: #{tpu_custom_call.1} parent=0
    #allocation2 [shape = 'u8[1024]{0}', space=vmem, size = 0x400, scoped, tag = 'input window, operand 0, single buffered']
    #allocation3 [shape = 's32[1]{0}', space=sflag, size = 0x4, scoped, tag = 'scoped memory for tpu_custom_call.1']
    #allocation4 [shape = 's32[1]{0}', space=sflag, size = 0x4, scoped, tag = 'scoped memory for tpu_custom_call.1']
    #allocation5 [shape = 'u8[4096]{0}', space=vmem, size = 0x1000, scoped, tag = 'input window, operand 1, single buffered']
    #allocation6 [shape = 's32[1]{0}', space=sflag, size = 0x4, scoped, tag = 'scoped memory for tpu_custom_call.1']
    #allocation7 [shape = 'u8[4096]{0}', space=vmem, size = 0x1000, scoped, tag = 'output window, operand 0, single buffered']
    %7 = vsyncpa [#allocation3], 0
    %8 = vsyncpa [#allocation6], 0
    %9 = vsyncpa [#allocation4], 0
    // Predicated region
    $region2: #{tpu_custom_call.1} parent=1 // pred_check
      _
    $region3: #{tpu_custom_call.1} parent=1 // pred_check_branch
      %11 = sbr.rel (0) target = $region5
    $region4: #{tpu_custom_call.1} parent=1 // pred_region
      %13 = vsyncadd [#allocation3], 0
      %s15 = sshll.u32 %s0, 4
      %s16 = int_to_ptr.hbm [resolvable:$true] %s15
      %s17 = sshll.u32 [#allocation2], 4
      %s18 = int_to_ptr.vmem [resolvable:$true] %s17
      %20 = dma.hbm_to_vmem [thread:$0]  %s16, 32, %s18, [#allocation3]
    $region5: #{tpu_custom_call.1} parent=1 // pred_fallthru
      _
    // Predicated region
    $region6: #{tpu_custom_call.1} parent=1 // pred_check
      _
    $region7: #{tpu_custom_call.1} parent=1 // pred_check_branch
      %22 = sbr.rel (0) target = $region9
    $region8: #{tpu_custom_call.1} parent=1 // pred_region
      %24 = vsyncadd [#allocation6], 0
      %s26 = sshll.u32 %s1, 4
      %s27 = int_to_ptr.hbm [resolvable:$true] %s26
      %s28 = sshll.u32 [#allocation5], 4
      %s29 = int_to_ptr.vmem [resolvable:$true] %s28
      %31 = dma.hbm_to_vmem [thread:$0]  %s27, 128, %s29, [#allocation6]
    $region9: #{tpu_custom_call.1} parent=1 // pred_fallthru
      _
    // Predicated region
    $region10: #{tpu_custom_call.1} parent=1 // pred_check
      _
    $region11: #{tpu_custom_call.1} parent=1 // pred_check_branch
      %33 = sbr.rel (0) target = $region13
    $region12: #{tpu_custom_call.1} parent=1 // pred_region
      %35 = dma.done [#allocation3], 32
    $region13: #{tpu_custom_call.1} parent=1 // pred_fallthru
      _
    // Predicated region
    $region14: #{tpu_custom_call.1} parent=1 // pred_check
      _
    $region15: #{tpu_custom_call.1} parent=1 // pred_check_branch
      %37 = sbr.rel (0) target = $region17
    $region16: #{tpu_custom_call.1} parent=1 // pred_region
      %39 = dma.done [#allocation6], 128
    $region17: #{tpu_custom_call.1} parent=1 // pred_fallthru
      _
    %v40 = vld [vmem:[#allocation5] sm:$0xff]
    %v41 = vld [vmem:[#allocation2] sm:$0x3]
    %v43 = vperm.slane %v41, 0
    %v44 = vperm.slane %v41, 1
    %v45 = vrot.slane %v44, 4
    %vm46 = vcmask 1043456
    %v47 = vsel %vm46, %v43, %v45
    %v49 = vmul.f32 %v40, %v47
    %50 = vst [vmem:[#allocation7] sm:$0xff] %v49
    // Predicated region
    $region18: #{tpu_custom_call.1} parent=1 // pred_check
      _
    $region19: #{tpu_custom_call.1} parent=1 // pred_check_branch
      %52 = sbr.rel (0) target = $region21
    $region20: #{tpu_custom_call.1} parent=1 // pred_region
      %54 = vsyncadd [#allocation4], 0
      %s56 = sshll.u32 [#allocation7], 4
      %s57 = int_to_ptr.vmem [resolvable:$true] %s56
      %s58 = sshll.u32 %s2, 4
      %s59 = int_to_ptr.hbm [resolvable:$true] %s58
      %61 = dma.vmem_to_hbm [thread:$0]  %s57, 128, %s59, [#allocation4]
    $region21: #{tpu_custom_call.1} parent=1 // pred_fallthru
      _
    // Predicated region
    $region22: #{tpu_custom_call.1} parent=1 // pred_check
      _
    $region23: #{tpu_custom_call.1} parent=1 // pred_check_branch
      %63 = sbr.rel (0) target = $region25
    $region24: #{tpu_custom_call.1} parent=1 // pred_region
      %65 = dma.done [#allocation4], 128
    $region25: #{tpu_custom_call.1} parent=1 // pred_fallthru
      _
    %66 = vsyncpa [#allocation3], 1
    %67 = vsyncpa [#allocation6], 1
    %68 = vsyncpa [#allocation4], 1

</llo_original>
